<compile_context>
chip_gen: v6e
topology: v6e:2x2x1
jax: 0.10.0
libtpu: 0.0.40
codegen_flags: <defaults>
</compile_context>

<pallas_src>
import jax
import jax.numpy as jnp
from jax.experimental import pallas as pl
from jax.experimental.pallas import tpu as pltpu

INPUT_SIZE = 784
HIDDEN = 50
NUM_CLASSES = 10

HIDDEN_PAD = 128   # lane-dense hidden width
OUT_PAD = 128      # lane-dense output width (sliced back to NUM_CLASSES)


def _round_up(n, m):
    return (n + m - 1) // m * m


def mlp_kernel(x_ref, w1_ref, b1_ref, w2_ref, b2_ref, out_ref):
    # x tile: (TB, 784) f32.  Weights are pre-cast to bf16 and lane-padded.
    x = x_ref[...]

    # fc1: bf16 MXU operands, f32 accumulation.
    h = jnp.dot(x.astype(jnp.bfloat16), w1_ref[...],
                preferred_element_type=jnp.float32)          # (TB, 128) f32
    # bias + ReLU in f32 (padded hidden columns are exactly 0 and stay 0).
    h = jnp.maximum(h + b1_ref[...], 0.0)

    # fc2: bf16 MXU operands, f32 accumulation.
    y = jnp.dot(h.astype(jnp.bfloat16), w2_ref[...],
                preferred_element_type=jnp.float32)          # (TB, 128) f32
    out_ref[...] = (y + b2_ref[...]).astype(out_ref.dtype)


def nn_forward(x, w1, b1, w2, b2, *, block_b=1024):
    """Forward pass of NN:  relu(x @ w1.T + b1) @ w2.T + b2.

    Arguments use the PyTorch nn.Linear layout:
      x : (B, 784) f32
      w1: (50, 784) f32,  b1: (50,) f32
      w2: (10, 50)  f32,  b2: (10,) f32
    Returns (B, 10) f32.
    """
    B = x.shape[0]

    # ---- layout plumbing (outside the kernel): transpose, lane-pad, cast ----
    w1_p = jnp.zeros((INPUT_SIZE, HIDDEN_PAD), jnp.bfloat16)
    w1_p = w1_p.at[:, :HIDDEN].set(w1.T.astype(jnp.bfloat16))
    b1_p = jnp.zeros((1, HIDDEN_PAD), jnp.float32).at[:, :HIDDEN].set(b1)

    w2_p = jnp.zeros((HIDDEN_PAD, OUT_PAD), jnp.bfloat16)
    w2_p = w2_p.at[:HIDDEN, :NUM_CLASSES].set(w2.T.astype(jnp.bfloat16))
    b2_p = jnp.zeros((1, OUT_PAD), jnp.float32).at[:, :NUM_CLASSES].set(b2)

    # ---- batch tiling: TB multiple of 8 (f32 sublane), pad B up to TB ----
    tb = min(block_b, _round_up(B, 8))
    b_pad = _round_up(B, tb)
    if b_pad != B:
        x = jnp.pad(x, ((0, b_pad - B), (0, 0)))

    grid = (b_pad // tb,)

    out = pl.pallas_call(
        mlp_kernel,
        out_shape=jax.ShapeDtypeStruct((b_pad, OUT_PAD), jnp.float32),
        grid_spec=pltpu.PrefetchScalarGridSpec(
            num_scalar_prefetch=0,
            grid=grid,
            in_specs=[
                # streamed per grid step
                pl.BlockSpec((tb, INPUT_SIZE), lambda i: (i, 0)),
                # VMEM-resident across all steps (constant block index)
                pl.BlockSpec((INPUT_SIZE, HIDDEN_PAD), lambda i: (0, 0)),
                pl.BlockSpec((1, HIDDEN_PAD), lambda i: (0, 0)),
                pl.BlockSpec((HIDDEN_PAD, OUT_PAD), lambda i: (0, 0)),
                pl.BlockSpec((1, OUT_PAD), lambda i: (0, 0)),
            ],
            out_specs=pl.BlockSpec((tb, OUT_PAD), lambda i: (i, 0)),
        ),
        compiler_params=pltpu.CompilerParams(
            # batch axis is independent across steps -> megacore-shardable
            dimension_semantics=("parallel",)),
    )(x, w1_p, b1_p, w2_p, b2_p)

    # slice padded batch / padded classes back to the module's shape
    return out[:B, :NUM_CLASSES]


def init_params(key):
    """Deterministic init mirroring nn.Linear (PyTorch (out, in) layout)."""
    k1, k2, k3, k4 = jax.random.split(key, 4)
    bound1 = 1.0 / (INPUT_SIZE ** 0.5)
    bound2 = 1.0 / (HIDDEN ** 0.5)
    w1 = jax.random.uniform(k1, (HIDDEN, INPUT_SIZE), jnp.float32,
                            minval=-bound1, maxval=bound1)
    b1 = jax.random.uniform(k2, (HIDDEN,), jnp.float32,
                            minval=-bound1, maxval=bound1)
    w2 = jax.random.uniform(k3, (NUM_CLASSES, HIDDEN), jnp.float32,
                            minval=-bound2, maxval=bound2)
    b2 = jax.random.uniform(k4, (NUM_CLASSES,), jnp.float32,
                            minval=-bound2, maxval=bound2)
    return w1, b1, w2, b2


if __name__ == "__main__":
    key = jax.random.PRNGKey(0)
    k_x, k_p = jax.random.split(key)

    B = 64  # matches the spec's `x = torch.rand(64, 784)`
    x = jax.random.uniform(k_x, (B, INPUT_SIZE), jnp.float32)
    w1, b1, w2, b2 = init_params(k_p)

    # Use a small batch tile here so the test exercises a multi-step grid
    # (4 steps) with VMEM-resident weights; real callers use the default
    # block_b=1024.
    out = nn_forward(x, w1, b1, w2, b2, block_b=16)
    out = jax.block_until_ready(out)

    # Reference check against the plain-JAX f32 forward (module semantics).
    # Tolerance accounts for bf16 MXU operands (f32 accumulation).
    ref = jnp.maximum(x @ w1.T + b1, 0.0) @ w2.T + b2
    assert out.shape == (B, NUM_CLASSES)
    assert jnp.allclose(out, ref, atol=1e-2, rtol=1e-2), (
        float(jnp.max(jnp.abs(out - ref))))

    print("KERNEL_OK")
</pallas_src>

<mosaic_0001>
module attributes {stable_mosaic.version = 11 : i64} {
  func.func @mlp_kernel(%arg0: i32, %arg1: memref<16x784xf32, #tpu.memory_space<vmem>>, %arg2: memref<784x128xbf16, #tpu.memory_space<vmem>>, %arg3: memref<1x128xf32, #tpu.memory_space<vmem>>, %arg4: memref<128x128xbf16, #tpu.memory_space<vmem>>, %arg5: memref<1x128xf32, #tpu.memory_space<vmem>>, %arg6: memref<16x128xf32, #tpu.memory_space<vmem>>) attributes {dimension_semantics = [#tpu.dimension_semantics<parallel>], iteration_bounds = array<i64: 4>, scalar_prefetch = 0 : i64, scratch_operands = 0 : i64, tpu.core_type = #tpu.core_type<tc>, window_params = [{transform_indices = @transform_0, window_bounds = array<i64: 16, 784>}, {pipeline_mode = #tpu.pipeline_mode<synchronous>, transform_indices = @transform_1, window_bounds = array<i64: 784, 128>}, {pipeline_mode = #tpu.pipeline_mode<synchronous>, transform_indices = @transform_2, window_bounds = array<i64: 1, 128>}, {pipeline_mode = #tpu.pipeline_mode<synchronous>, transform_indices = @transform_3, window_bounds = array<i64: 128, 128>}, {pipeline_mode = #tpu.pipeline_mode<synchronous>, transform_indices = @transform_4, window_bounds = array<i64: 1, 128>}, {transform_indices = @transform_5, window_bounds = array<i64: 16, 128>}]} {
    %c0 = arith.constant 0 : index
    %c0_0 = arith.constant 0 : index
    %0 = vector.load %arg1[%c0, %c0_0] : memref<16x784xf32, #tpu.memory_space<vmem>>, vector<16x784xf32>
    %1 = arith.truncf %0 : vector<16x784xf32> to vector<16x784xbf16>
    %c0_1 = arith.constant 0 : index
    %c0_2 = arith.constant 0 : index
    %2 = vector.load %arg2[%c0_1, %c0_2] : memref<784x128xbf16, #tpu.memory_space<vmem>>, vector<784x128xbf16>
    %cst = arith.constant dense<0.000000e+00> : vector<16x128xf32>
    %3 = tpu.matmul %1, %2, %cst {dimension_numbers = #tpu.dot_dimension_numbers<[1], [0], [0], [1], [0, 0, 1, 1], [], []>} : vector<16x784xbf16>, vector<784x128xbf16>, vector<16x128xf32> -> vector<16x128xf32>
    %c0_3 = arith.constant 0 : index
    %c0_4 = arith.constant 0 : index
    %4 = vector.load %arg3[%c0_3, %c0_4] : memref<1x128xf32, #tpu.memory_space<vmem>>, vector<1x128xf32>
    %5 = vector.broadcast %4 : vector<1x128xf32> to vector<16x128xf32>
    %6 = arith.addf %3, %5 : vector<16x128xf32>
    %cst_5 = arith.constant 0.000000e+00 : f32
    %7 = vector.broadcast %cst_5 : f32 to vector<16x128xf32>
    %8 = arith.maximumf %6, %7 : vector<16x128xf32>
    %9 = arith.truncf %8 : vector<16x128xf32> to vector<16x128xbf16>
    %c0_6 = arith.constant 0 : index
    %c0_7 = arith.constant 0 : index
    %10 = vector.load %arg4[%c0_6, %c0_7] : memref<128x128xbf16, #tpu.memory_space<vmem>>, vector<128x128xbf16>
    %cst_8 = arith.constant dense<0.000000e+00> : vector<16x128xf32>
    %11 = tpu.matmul %9, %10, %cst_8 {dimension_numbers = #tpu.dot_dimension_numbers<[1], [0], [0], [1], [0, 0, 1, 1], [], []>} : vector<16x128xbf16>, vector<128x128xbf16>, vector<16x128xf32> -> vector<16x128xf32>
    %c0_9 = arith.constant 0 : index
    %c0_10 = arith.constant 0 : index
    %12 = vector.load %arg5[%c0_9, %c0_10] : memref<1x128xf32, #tpu.memory_space<vmem>>, vector<1x128xf32>
    %13 = vector.broadcast %12 : vector<1x128xf32> to vector<16x128xf32>
    %14 = arith.addf %11, %13 : vector<16x128xf32>
    %c0_11 = arith.constant 0 : index
    %c0_12 = arith.constant 0 : index
    %15 = vector.load %arg6[%c0_11, %c0_12] : memref<16x128xf32, #tpu.memory_space<vmem>>, vector<16x128xf32>
    tpu.vector_store %arg6[%c0_11, %c0_12], %14 {strides = array<i32>} : memref<16x128xf32, #tpu.memory_space<vmem>>, vector<16x128xf32>,
    return
  }
  func.func @transform_0(%arg0: i32) -> (i32, i32) {
    %c0_i32 = arith.constant 0 : i32
    %c0_i32_0 = arith.constant 0 : i32
    return %arg0, %c0_i32 : i32, i32
  }
  func.func @transform_1(%arg0: i32) -> (i32, i32) {
    %c0_i32 = arith.constant 0 : i32
    %c0_i32_0 = arith.constant 0 : i32
    %c0_i32_1 = arith.constant 0 : i32
    return %c0_i32, %c0_i32_0 : i32, i32
  }
  func.func @transform_2(%arg0: i32) -> (i32, i32) {
    %c0_i32 = arith.constant 0 : i32
    %c0_i32_0 = arith.constant 0 : i32
    %c0_i32_1 = arith.constant 0 : i32
    return %c0_i32, %c0_i32_0 : i32, i32
  }
  func.func @transform_3(%arg0: i32) -> (i32, i32) {
    %c0_i32 = arith.constant 0 : i32
    %c0_i32_0 = arith.constant 0 : i32
    %c0_i32_1 = arith.constant 0 : i32
    return %c0_i32, %c0_i32_0 : i32, i32
  }
  func.func @transform_4(%arg0: i32) -> (i32, i32) {
    %c0_i32 = arith.constant 0 : i32
    %c0_i32_0 = arith.constant 0 : i32
    %c0_i32_1 = arith.constant 0 : i32
    return %c0_i32, %c0_i32_0 : i32, i32
  }
  func.func @transform_5(%arg0: i32) -> (i32, i32) {
    %c0_i32 = arith.constant 0 : i32
    %c0_i32_0 = arith.constant 0 : i32
    return %arg0, %c0_i32 : i32, i32
  }
}

</mosaic_0001>

<llo_original>
// kernel: tpu_custom_call.1
$region0: #{tpu_custom_call.1}
  #allocation0 [shape = 'u32[]', space=smem, size = 0x4, offset = 0x4, fixed_abs, tag = 'smem constant byte address 0x4 - core index']
  #allocation1 [shape = 'u32[144,128]{1,0:T(1,128)}', space=vmem, size = 0x12000, scoped, tag = 'internal scratch']
  %s0 = inlined_call_operand.hbm [shape: f32[64,784], index: 0, kind: input, shape index: {}]
  %s1 = inlined_call_operand.hbm [shape: bf16[784,128], index: 1, kind: input, shape index: {}]
  %s2 = inlined_call_operand.vmem [shape: f32[1,128], index: 2, kind: input, shape index: {}]
  %s3 = inlined_call_operand.hbm [shape: bf16[128,128], index: 3, kind: input, shape index: {}]
  %s4 = inlined_call_operand.vmem [shape: f32[1,128], index: 4, kind: input, shape index: {}]
  %s5 = inlined_call_operand.hbm [shape: f32[64,128], index: 5, kind: output, shape index: {}]
  %s6 = sld [smem:[#allocation0]]
  $region65: #{tpu_custom_call.1} parent=0
    _
  %s8 = ssub.s32 1, %s6
  %s9 = scalar_select 0, %s8, %s6
  $region1: #{tpu_custom_call.1} parent=0
    #allocation2 [shape = 'u8[114688]{0}', space=vmem, size = 0x1c000, scoped, tag = 'input window, operand 0']
    #allocation3 [shape = 's32[2]{0}', space=sflag, size = 0x8, scoped, tag = 'scoped memory for tpu_custom_call.1']
    #allocation4 [shape = 's32[2]{0}', space=sflag, size = 0x8, scoped, tag = 'scoped memory for tpu_custom_call.1']
    #allocation5 [shape = 'u8[200704]{0}', space=vmem, size = 0x31000, scoped, tag = 'input window, operand 1, single buffered']
    #allocation6 [shape = 's32[1]{0}', space=sflag, size = 0x4, scoped, tag = 'scoped memory for tpu_custom_call.1']
    #allocation7 [shape = 'u8[32768]{0}', space=vmem, size = 0x8000, scoped, tag = 'input window, operand 3, single buffered']
    #allocation8 [shape = 'u8[16384]{0}', space=vmem, size = 0x4000, scoped, tag = 'output window, operand 0']
    %10 = vsyncpa [#allocation3], 0
    %s11 = scalar_lea.sflag [#allocation3], 1
    %12 = vsyncpa %s11, 0
    %13 = vsyncpa [#allocation6], 0
    %14 = vsyncpa [#allocation4], 0
    %s15 = scalar_lea.sflag [#allocation4], 1
    %16 = vsyncpa %s15, 0
    loop: start=0, step=1, limit=6
    $region2: #{tpu_custom_call.1} parent=1 // loop_pre_header
      _
    $region3: #{tpu_custom_call.1} parent=1 // loop_header
      %s18 = sphi 0, %s22
      %p19 = scmp.ge.s32.totalorder %s18, 6
      %s28 = sphi 0, %s30
      %s31 = sphi 0, %s28
      %s32 = sphi 0, %s31
      %s48 = sphi 0, %s32
      %s52 = sphi 0, %s52
      %s54 = sphi 0, %s52
      %s55 = sphi 0, %s54
      %s69 = sphi 0, %s55
      %s73 = sphi 0, %s73
      %s75 = sphi 0, %s73
      %s76 = sphi 0, %s75
      %s90 = sphi 0, %s76
      %s94 = sphi 0, %s94
      %s96 = sphi 0, %s94
      %s97 = sphi 0, %s96
      %s111 = sphi 0, %s97
      %s115 = sphi 0, %s115
      %s117 = sphi 0, %s115
      %s118 = sphi 0, %s117
      %s132 = sphi 0, %s118
      %s138 = sphi 0, %s140
      %s141 = sphi 0, %s138
      %s142 = sphi 0, %s141
      %s158 = sphi 0, %s142
    $region4: #{tpu_custom_call.1} parent=1 // loop_header_branch
      %21 = sbr.rel (%p19) target = $region8
    $region5: #{tpu_custom_call.1} parent=1 // loop_body
      %s23 = ssub.s32 %s18, 1
      %s24 = ssub.s32 %s18, 2
      %s25 = sadd.s32 %s18, 1
      %s26 = ssub.s32 %s18, %s25
      %p27 = scmp.eq.s32.totalorder %s26, 0
      %s29 = sadd.s32 %s28, 1
      %s30 = scalar_select %p27, %s28, %s29
      %p33 = pneg %p27
      %p34 = scmp.eq.s32.totalorder %s18, 3
      %p35 = por %p33, %p34
      %p36 = scmp.ne.s32.totalorder %s28, %s31
      %p37 = scmp.eq.s32.totalorder %s18, 0
      %p38 = por %p36, %p37
      %p39 = scmp.ne.s32.totalorder %s28, %s31
      %p40 = scmp.eq.s32.totalorder %s23, 3
      %p41 = por %p39, %p40
      %p42 = scmp.ne.s32.totalorder %s31, %s32
      %p43 = scmp.eq.s32.totalorder %s23, 0
      %p44 = por %p42, %p43
      %p45 = scmp.ne.s32.totalorder %s31, %s32
      %p46 = scmp.eq.s32.totalorder %s24, 3
      %p47 = por %p45, %p46
      %p49 = scmp.ne.s32.totalorder %s32, %s48
      %p50 = scmp.eq.s32.totalorder %s24, 0
      %p51 = por %p49, %p50
      %s53 = sadd.s32 %s52, 1
      %p56 = scmp.eq.s32.totalorder %s18, 3
      %p57 = scmp.ne.s32.totalorder %s52, %s54
      %p58 = scmp.eq.s32.totalorder %s18, 0
      %p59 = por %p57, %p58
      %p60 = scmp.ne.s32.totalorder %s52, %s54
      %p61 = scmp.eq.s32.totalorder %s23, 3
      %p62 = por %p60, %p61
      %p63 = scmp.ne.s32.totalorder %s54, %s55
      %p64 = scmp.eq.s32.totalorder %s23, 0
      %p65 = por %p63, %p64
      %p66 = scmp.ne.s32.totalorder %s54, %s55
      %p67 = scmp.eq.s32.totalorder %s24, 3
      %p68 = por %p66, %p67
      %p70 = scmp.ne.s32.totalorder %s55, %s69
      %p71 = scmp.eq.s32.totalorder %s24, 0
      %p72 = por %p70, %p71
      %s74 = sadd.s32 %s73, 1
      %p77 = scmp.eq.s32.totalorder %s18, 3
      %p78 = scmp.ne.s32.totalorder %s73, %s75
      %p79 = scmp.eq.s32.totalorder %s18, 0
      %p80 = por %p78, %p79
      %p81 = scmp.ne.s32.totalorder %s73, %s75
      %p82 = scmp.eq.s32.totalorder %s23, 3
      %p83 = por %p81, %p82
      %p84 = scmp.ne.s32.totalorder %s75, %s76
      %p85 = scmp.eq.s32.totalorder %s23, 0
      %p86 = por %p84, %p85
      %p87 = scmp.ne.s32.totalorder %s75, %s76
      %p88 = scmp.eq.s32.totalorder %s24, 3
      %p89 = por %p87, %p88
      %p91 = scmp.ne.s32.totalorder %s76, %s90
      %p92 = scmp.eq.s32.totalorder %s24, 0
      %p93 = por %p91, %p92
      %s95 = sadd.s32 %s94, 1
      %p98 = scmp.eq.s32.totalorder %s18, 3
      %p99 = scmp.ne.s32.totalorder %s94, %s96
      %p100 = scmp.eq.s32.totalorder %s18, 0
      %p101 = por %p99, %p100
      %p102 = scmp.ne.s32.totalorder %s94, %s96
      %p103 = scmp.eq.s32.totalorder %s23, 3
      %p104 = por %p102, %p103
      %p105 = scmp.ne.s32.totalorder %s96, %s97
      %p106 = scmp.eq.s32.totalorder %s23, 0
      %p107 = por %p105, %p106
      %p108 = scmp.ne.s32.totalorder %s96, %s97
      %p109 = scmp.eq.s32.totalorder %s24, 3
      %p110 = por %p108, %p109
      %p112 = scmp.ne.s32.totalorder %s97, %s111
      %p113 = scmp.eq.s32.totalorder %s24, 0
      %p114 = por %p112, %p113
      %s116 = sadd.s32 %s115, 1
      %p119 = scmp.eq.s32.totalorder %s18, 3
      %p120 = scmp.ne.s32.totalorder %s115, %s117
      %p121 = scmp.eq.s32.totalorder %s18, 0
      %p122 = por %p120, %p121
      %p123 = scmp.ne.s32.totalorder %s115, %s117
      %p124 = scmp.eq.s32.totalorder %s23, 3
      %p125 = por %p123, %p124
      %p126 = scmp.ne.s32.totalorder %s117, %s118
      %p127 = scmp.eq.s32.totalorder %s23, 0
      %p128 = por %p126, %p127
      %p129 = scmp.ne.s32.totalorder %s117, %s118
      %p130 = scmp.eq.s32.totalorder %s24, 3
      %p131 = por %p129, %p130
      %p133 = scmp.ne.s32.totalorder %s118, %s132
      %p134 = scmp.eq.s32.totalorder %s24, 0
      %p135 = por %p133, %p134
      %s136 = ssub.s32 %s18, %s25
      %p137 = scmp.eq.s32.totalorder %s136, 0
      %s139 = sadd.s32 %s138, 1
      %s140 = scalar_select %p137, %s138, %s139
      %p143 = pneg %p137
      %p144 = scmp.eq.s32.totalorder %s18, 3
      %p145 = por %p143, %p144
      %p146 = scmp.ne.s32.totalorder %s138, %s141
      %p147 = scmp.eq.s32.totalorder %s18, 0
      %p148 = por %p146, %p147
      %p149 = scmp.ne.s32.totalorder %s138, %s141
      %p150 = scmp.eq.s32.totalorder %s23, 3
      %p151 = por %p149, %p150
      %p152 = scmp.ne.s32.totalorder %s141, %s142
      %p153 = scmp.eq.s32.totalorder %s23, 0
      %p154 = por %p152, %p153
      %p155 = scmp.ne.s32.totalorder %s141, %s142
      %p156 = scmp.eq.s32.totalorder %s24, 3
      %p157 = por %p155, %p156
      %p159 = scmp.ne.s32.totalorder %s142, %s158
      %p160 = scmp.eq.s32.totalorder %s24, 0
      %p161 = por %p159, %p160
      %p162 = scmp.le.s32.totalorder 1, %s18
      %p163 = scmp.lt.s32.totalorder %s18, 5
      %p164 = pnand %p162, %p163
      %p165 = pneg %p164
      // Predicated region
      $region9: #{tpu_custom_call.1} parent=5 // pred_check
        _
      $region10: #{tpu_custom_call.1} parent=5 // pred_check_branch
        %167 = sbr.rel (%p164) target = $region12
      $region11: #{tpu_custom_call.1} parent=5 // pred_region
        %s168 = ssub.s32 %s18, 1
        // Predicated region
        $region13: #{tpu_custom_call.1} parent=11 // pred_check
          %p169 = pneg %p65
        $region14: #{tpu_custom_call.1} parent=11 // pred_check_branch
          %171 = sbr.rel (%p169) target = $region16
        $region15: #{tpu_custom_call.1} parent=11 // pred_region
          %s173 = ssub.s32 6272, 6272
          %174 = vsyncadd [#allocation6], %s173
          %s175 = sshll.u32 [#allocation5], 4
          %s176 = int_to_ptr.vmem [resolvable:$true] %s175
          %181 = dma.hbm_to_vmem [thread:$0]  %s1, 6272, %s176, [#allocation6], 64, 64, 4
        $region16: #{tpu_custom_call.1} parent=11 // pred_fallthru
          _
        // Predicated region
        $region17: #{tpu_custom_call.1} parent=11 // pred_check
          %p182 = pneg %p86
        $region18: #{tpu_custom_call.1} parent=11 // pred_check_branch
          %184 = sbr.rel (%p182) target = $region20
        $region19: #{tpu_custom_call.1} parent=11 // pred_region
          _
        $region20: #{tpu_custom_call.1} parent=11 // pred_fallthru
          _
        // Predicated region
        $region21: #{tpu_custom_call.1} parent=11 // pred_check
          %p185 = pneg %p107
        $region22: #{tpu_custom_call.1} parent=11 // pred_check_branch
          %187 = sbr.rel (%p185) target = $region24
        $region23: #{tpu_custom_call.1} parent=11 // pred_region
          %s189 = ssub.s32 1024, 1024
          %190 = vsyncadd [#allocation6], %s189
          %s191 = sshll.u32 [#allocation7], 4
          %s192 = int_to_ptr.vmem [resolvable:$true] %s191
          %197 = dma.hbm_to_vmem [thread:$0]  %s3, 1024, %s192, [#allocation6], 64, 64, 4
        $region24: #{tpu_custom_call.1} parent=11 // pred_fallthru
          _
        // Predicated region
        $region25: #{tpu_custom_call.1} parent=11 // pred_check
          %p198 = pneg %p128
        $region26: #{tpu_custom_call.1} parent=11 // pred_check_branch
          %200 = sbr.rel (%p198) target = $region28
        $region27: #{tpu_custom_call.1} parent=11 // pred_region
          _
        $region28: #{tpu_custom_call.1} parent=11 // pred_fallthru
          _
      $region12: #{tpu_custom_call.1} parent=5 // pred_fallthru
        _
      %p201 = scmp.lt.s32.totalorder %s18, 4
      // Predicated region
      $region29: #{tpu_custom_call.1} parent=5 // pred_check
        %p202 = pneg %p201
      $region30: #{tpu_custom_call.1} parent=5 // pred_check_branch
        %204 = sbr.rel (%p202) target = $region32
      $region31: #{tpu_custom_call.1} parent=5 // pred_region
        // Predicated region
        $region33: #{tpu_custom_call.1} parent=31 // pred_check
          %p205 = pneg %p38
        $region34: #{tpu_custom_call.1} parent=31 // pred_check_branch
          %207 = sbr.rel (%p205) target = $region36
        $region35: #{tpu_custom_call.1} parent=31 // pred_region
          %s208 = sand.u32 %s28, 1
          %s209 = scalar_lea.sflag [#allocation3], %s208
          %s210 = sand.u32 %s28, 1
          %s211 = smul.addr %s210, 112
          %s212 = scalar_lea.vmem [#allocation2], %s211
          %s213 = smul.u32 2, %s18
          %s215 = ssub.s32 1792, 1792
          %216 = vsyncadd %s209, %s215
          %s217 = smul.addr %s213, 7
          %s218 = smul.addr %s217, 128
          %s219 = scalar_lea.hbm %s0, %s218
          %s220 = sshll.u32 %s212, 4
          %s221 = int_to_ptr.vmem [resolvable:$true] %s220
          %226 = dma.hbm_to_vmem [thread:$0]  %s219, 1792, %s221, %s209, 896, 896, 56
        $region36: #{tpu_custom_call.1} parent=31 // pred_fallthru
          _
      $region32: #{tpu_custom_call.1} parent=5 // pred_fallthru
        _
      %p227 = scmp.le.s32.totalorder 1, %s18
      %p228 = scmp.lt.s32.totalorder %s18, 5
      %p229 = pnand %p227, %p228
      %p230 = pneg %p229
      // Predicated region
      $region37: #{tpu_custom_call.1} parent=5 // pred_check
        _
      $region38: #{tpu_custom_call.1} parent=5 // pred_check_branch
        %232 = sbr.rel (%p229) target = $region40
      $region39: #{tpu_custom_call.1} parent=5 // pred_region
        %s233 = ssub.s32 %s18, 1
        %s234 = sand.u32 %s31, 1
        %s235 = scalar_lea.sflag [#allocation3], %s234
        %s236 = sand.u32 %s31, 1
        %s237 = smul.addr %s236, 112
        %s238 = scalar_lea.vmem [#allocation2], %s237
        // Predicated region
        $region41: #{tpu_custom_call.1} parent=39 // pred_check
          %p239 = pneg %p44
        $region42: #{tpu_custom_call.1} parent=39 // pred_check_branch
          %241 = sbr.rel (%p239) target = $region44
        $region43: #{tpu_custom_call.1} parent=39 // pred_region
          %242 = dma.done %s235, 1792
        $region44: #{tpu_custom_call.1} parent=39 // pred_fallthru
          _
        // Predicated region
        $region45: #{tpu_custom_call.1} parent=39 // pred_check
          %p243 = pneg %p65
        $region46: #{tpu_custom_call.1} parent=39 // pred_check_branch
          %245 = sbr.rel (%p243) target = $region48
        $region47: #{tpu_custom_call.1} parent=39 // pred_region
          %246 = dma.done [#allocation6], 6272
        $region48: #{tpu_custom_call.1} parent=39 // pred_fallthru
          _
        // Predicated region
        $region49: #{tpu_custom_call.1} parent=39 // pred_check
          %p247 = pneg %p107
        $region50: #{tpu_custom_call.1} parent=39 // pred_check_branch
          %249 = sbr.rel (%p247) target = $region52
        $region51: #{tpu_custom_call.1} parent=39 // pred_region
          %250 = dma.done [#allocation6], 1024
        $region52: #{tpu_custom_call.1} parent=39 // pred_fallthru
          _
        %s251 = sand.u32 %s31, 1
        %s252 = scalar_lea.sflag [#allocation3], %s251
        %s253 = sand.u32 %s31, 1
        %s254 = smul.addr %s253, 112
        %s255 = scalar_lea.vmem [#allocation2], %s254
        %p256 = pneg %p44
        %p257 = pneg %p41
        %p258 = pneg %p65
        %p259 = pneg %p62
        %p260 = pneg %p86
        %p261 = pneg %p83
        %p262 = pneg %p107
        %p263 = pneg %p104
        %p264 = pneg %p128
        %p265 = pneg %p125
        %p266 = pneg %p154
        %p267 = pneg %p151
        %s268 = sand.u32 %s141, 1
        %s269 = scalar_lea.sflag [#allocation4], %s268
        %s270 = sand.u32 %s141, 1
        %s271 = smul.addr %s270, 16
        %s272 = scalar_lea.vmem [#allocation8], %s271
        %s273 = smul.u32 2, %s23
        %s274 = smul.u32 2, %s23
        %v276 = vld [vmem:[%s238] sm:$0xff]
        %v277 = vld [vmem:[%s238 + $0x8] sm:$0xff]
        %v278 = vld [vmem:[%s238 + $0x10] sm:$0xff]
        %v279 = vld [vmem:[%s238 + $0x18] sm:$0xff]
        %v280 = vld [vmem:[%s238 + $0x20] sm:$0xff]
        %v281 = vld [vmem:[%s238 + $0x28] sm:$0xff]
        %v282 = vld [vmem:[%s238 + $0x30] sm:$0xff]
        %v283 = vld [vmem:[%s238 + $0x38] sm:$0xff]
        %v284 = vld [vmem:[%s238 + $0x40] sm:$0xff]
        %v285 = vld [vmem:[%s238 + $0x48] sm:$0xff]
        %v286 = vld [vmem:[%s238 + $0x50] sm:$0xff]
        %v287 = vld [vmem:[%s238 + $0x58] sm:$0xff]
        %v288 = vld [vmem:[%s238 + $0x60] sm:$0xff]
        %v289 = vld [vmem:[%s238 + $0x68] sm:$0xff]
        %v290 = vpack.c.bf16 %v283, %v276
        %v291 = vpack.c.bf16 %v284, %v277
        %v292 = vpack.c.bf16 %v285, %v278
        %v293 = vpack.c.bf16 %v286, %v279
        %v294 = vpack.c.bf16 %v287, %v280
        %v295 = vpack.c.bf16 %v288, %v281
        %v296 = vpack.c.bf16 %v289, %v282
        %v297 = vld [vmem:[#allocation5] sm:$0xf]
        %v298 = vld [vmem:[#allocation5 + $0x4] sm:$0xf]
        %v299 = vld [vmem:[#allocation5 + $0x8] sm:$0xf]
        %v300 = vld [vmem:[#allocation5 + $0xc] sm:$0xf]
        %v301 = vld [vmem:[#allocation5 + $0x10] sm:$0xf]
        %v302 = vld [vmem:[#allocation5 + $0x14] sm:$0xf]
        %v303 = vld [vmem:[#allocation5 + $0x18] sm:$0xf]
        %v304 = vld [vmem:[#allocation5 + $0x1c] sm:$0xf]
        %v305 = vld [vmem:[#allocation5 + $0x20] sm:$0xf]
        %v306 = vld [vmem:[#allocation5 + $0x24] sm:$0xf]
        %v307 = vld [vmem:[#allocation5 + $0x28] sm:$0xf]
        %v308 = vld [vmem:[#allocation5 + $0x2c] sm:$0xf]
        %v309 = vld [vmem:[#allocation5 + $0x30] sm:$0xf]
        %v310 = vld [vmem:[#allocation5 + $0x34] sm:$0xf]
        %v311 = vld [vmem:[#allocation5 + $0x38] sm:$0xf]
        %v312 = vld [vmem:[#allocation5 + $0x3c] sm:$0xf]
        %v313 = vld [vmem:[#allocation5 + $0x40] sm:$0xf]
        %v314 = vld [vmem:[#allocation5 + $0x44] sm:$0xf]
        %v315 = vld [vmem:[#allocation5 + $0x48] sm:$0xf]
        %v316 = vld [vmem:[#allocation5 + $0x4c] sm:$0xf]
        %v317 = vld [vmem:[#allocation5 + $0x50] sm:$0xf]
        %v318 = vld [vmem:[#allocation5 + $0x54] sm:$0xf]
        %v319 = vld [vmem:[#allocation5 + $0x58] sm:$0xf]
        %v320 = vld [vmem:[#allocation5 + $0x5c] sm:$0xf]
        %v321 = vld [vmem:[#allocation5 + $0x60] sm:$0xf]
        %v322 = vld [vmem:[#allocation5 + $0x64] sm:$0xf]
        %v323 = vld [vmem:[#allocation5 + $0x68] sm:$0xf]
        %v324 = vld [vmem:[#allocation5 + $0x6c] sm:$0xf]
        %v325 = vld [vmem:[#allocation5 + $0x70] sm:$0xf]
        %v326 = vld [vmem:[#allocation5 + $0x74] sm:$0xf]
        %v327 = vld [vmem:[#allocation5 + $0x78] sm:$0xf]
        %v328 = vld [vmem:[#allocation5 + $0x7c] sm:$0xf]
        %v329 = vld [vmem:[#allocation5 + $0x80] sm:$0xf]
        %v330 = vld [vmem:[#allocation5 + $0x84] sm:$0xf]
        %v331 = vld [vmem:[#allocation5 + $0x88] sm:$0xf]
        %v332 = vld [vmem:[#allocation5 + $0x8c] sm:$0xf]
        %v333 = vld [vmem:[#allocation5 + $0x90] sm:$0xf]
        %v334 = vld [vmem:[#allocation5 + $0x94] sm:$0xf]
        %v335 = vld [vmem:[#allocation5 + $0x98] sm:$0xf]
        %v336 = vld [vmem:[#allocation5 + $0x9c] sm:$0xf]
        %v337 = vld [vmem:[#allocation5 + $0xa0] sm:$0xf]
        %v338 = vld [vmem:[#allocation5 + $0xa4] sm:$0xf]
        %v339 = vld [vmem:[#allocation5 + $0xa8] sm:$0xf]
        %v340 = vld [vmem:[#allocation5 + $0xac] sm:$0xf]
        %v341 = vld [vmem:[#allocation5 + $0xb0] sm:$0xf]
        %v342 = vld [vmem:[#allocation5 + $0xb4] sm:$0xf]
        %v343 = vld [vmem:[#allocation5 + $0xb8] sm:$0xf]
        %v344 = vld [vmem:[#allocation5 + $0xbc] sm:$0xf]
        %v345 = vld [vmem:[#allocation5 + $0xc0] sm:$0xf]
        %v346 = vld [vmem:[#allocation5 + $0xc4] sm:$0xf]
        %v347 = vld [vmem:[#allocation5 + $0xc8] sm:$0xf]
        %v348 = vld [vmem:[#allocation5 + $0xcc] sm:$0xf]
        %v349 = vld [vmem:[#allocation5 + $0xd0] sm:$0xf]
        %v350 = vld [vmem:[#allocation5 + $0xd4] sm:$0xf]
        %v351 = vld [vmem:[#allocation5 + $0xd8] sm:$0xf]
        %v352 = vld [vmem:[#allocation5 + $0xdc] sm:$0xf]
        %v353 = vld [vmem:[#allocation5 + $0xe0] sm:$0xf]
        %v354 = vld [vmem:[#allocation5 + $0xe4] sm:$0xf]
        %v355 = vld [vmem:[#allocation5 + $0xe8] sm:$0xf]
        %v356 = vld [vmem:[#allocation5 + $0xec] sm:$0xf]
        %v357 = vld [vmem:[#allocation5 + $0xf0] sm:$0xf]
        %v358 = vld [vmem:[#allocation5 + $0xf4] sm:$0xf]
        %v359 = vld [vmem:[#allocation5 + $0xf8] sm:$0xf]
        %v360 = vld [vmem:[#allocation5 + $0xfc] sm:$0xf]
        %v361 = vld [vmem:[#allocation5 + $0x100] sm:$0xf]
        %v362 = vld [vmem:[#allocation5 + $0x104] sm:$0xf]
        %v363 = vld [vmem:[#allocation5 + $0x108] sm:$0xf]
        %v364 = vld [vmem:[#allocation5 + $0x10c] sm:$0xf]
        %v365 = vld [vmem:[#allocation5 + $0x110] sm:$0xf]
        %v366 = vld [vmem:[#allocation5 + $0x114] sm:$0xf]
        %v367 = vld [vmem:[#allocation5 + $0x118] sm:$0xf]
        %v368 = vld [vmem:[#allocation5 + $0x11c] sm:$0xf]
        %v369 = vld [vmem:[#allocation5 + $0x120] sm:$0xf]
        %v370 = vld [vmem:[#allocation5 + $0x124] sm:$0xf]
        %v371 = vld [vmem:[#allocation5 + $0x128] sm:$0xf]
        %v372 = vld [vmem:[#allocation5 + $0x12c] sm:$0xf]
        %v373 = vld [vmem:[#allocation5 + $0x130] sm:$0xf]
        %v374 = vld [vmem:[#allocation5 + $0x134] sm:$0xf]
        %v375 = vld [vmem:[#allocation5 + $0x138] sm:$0xf]
        %v376 = vld [vmem:[#allocation5 + $0x13c] sm:$0xf]
        %v377 = vld [vmem:[#allocation5 + $0x140] sm:$0xf]
        %v378 = vld [vmem:[#allocation5 + $0x144] sm:$0xf]
        %v379 = vld [vmem:[#allocation5 + $0x148] sm:$0xf]
        %v380 = vld [vmem:[#allocation5 + $0x14c] sm:$0xf]
        %v381 = vld [vmem:[#allocation5 + $0x150] sm:$0xf]
        %v382 = vld [vmem:[#allocation5 + $0x154] sm:$0xf]
        %v383 = vld [vmem:[#allocation5 + $0x158] sm:$0xf]
        %v384 = vld [vmem:[#allocation5 + $0x15c] sm:$0xf]
        %v385 = vld [vmem:[#allocation5 + $0x160] sm:$0xf]
        %v386 = vld [vmem:[#allocation5 + $0x164] sm:$0xf]
        %v387 = vld [vmem:[#allocation5 + $0x168] sm:$0xf]
        %v388 = vld [vmem:[#allocation5 + $0x16c] sm:$0xf]
        %v389 = vld [vmem:[#allocation5 + $0x170] sm:$0xf]
        %v390 = vld [vmem:[#allocation5 + $0x174] sm:$0xf]
        %v391 = vld [vmem:[#allocation5 + $0x178] sm:$0xf]
        %v392 = vld [vmem:[#allocation5 + $0x17c] sm:$0xf]
        %v393 = vld [vmem:[#allocation5 + $0x180] sm:$0xf]
        %v394 = vld [vmem:[#allocation5 + $0x184] sm:$0xf]
        %v395 = vld [vmem:[%s2] sm:$0x1]
        %v397 = vlaneseq
        %v398 = vshrl.u32 %v397, 7
        %v399 = vsub.s32 0, %v398
        %v400 = vrot.slane %v395, %v399
        %v500 = vunpack.c.l.b16 %v297
        %v501 = vunpack.c.l.b16 %v298
        %v502 = vunpack.c.l.b16 %v299
        %v503 = vunpack.c.l.b16 %v300
        %v504 = vunpack.c.l.b16 %v301
        %v505 = vunpack.c.l.b16 %v302
        %v506 = vunpack.c.l.b16 %v303
        %v507 = vunpack.c.l.b16 %v304
        %v508 = vunpack.c.l.b16 %v305
        %v509 = vunpack.c.l.b16 %v306
        %v510 = vunpack.c.l.b16 %v307
        %v511 = vunpack.c.l.b16 %v308
        %v512 = vunpack.c.l.b16 %v309
        %v513 = vunpack.c.l.b16 %v310
        %v514 = vunpack.c.l.b16 %v311
        %v515 = vunpack.c.l.b16 %v312
        %v516 = vunpack.c.l.b16 %v313
        %v517 = vunpack.c.l.b16 %v314
        %v518 = vunpack.c.l.b16 %v315
        %v519 = vunpack.c.l.b16 %v316
        %v520 = vunpack.c.l.b16 %v317
        %v521 = vunpack.c.l.b16 %v318
        %v522 = vunpack.c.l.b16 %v319
        %v523 = vunpack.c.l.b16 %v320
        %v524 = vunpack.c.l.b16 %v321
        %v525 = vunpack.c.l.b16 %v322
        %v526 = vunpack.c.l.b16 %v323
        %v527 = vunpack.c.l.b16 %v324
        %v528 = vunpack.c.l.b16 %v325
        %v529 = vunpack.c.l.b16 %v326
        %v530 = vunpack.c.l.b16 %v327
        %v531 = vunpack.c.l.b16 %v328
        %v532 = vunpack.c.l.b16 %v329
        %v533 = vunpack.c.l.b16 %v330
        %v534 = vunpack.c.l.b16 %v331
        %v535 = vunpack.c.l.b16 %v332
        %v536 = vunpack.c.l.b16 %v333
        %v537 = vunpack.c.l.b16 %v334
        %v538 = vunpack.c.l.b16 %v335
        %v539 = vunpack.c.l.b16 %v336
        %v540 = vunpack.c.l.b16 %v337
        %v541 = vunpack.c.l.b16 %v338
        %v542 = vunpack.c.l.b16 %v339
        %v543 = vunpack.c.l.b16 %v340
        %v544 = vunpack.c.l.b16 %v341
        %v545 = vunpack.c.l.b16 %v342
        %v546 = vunpack.c.l.b16 %v343
        %v547 = vunpack.c.l.b16 %v344
        %v548 = vunpack.c.l.b16 %v345
        %v549 = vunpack.c.l.b16 %v346
        %v550 = vunpack.c.l.b16 %v347
        %v551 = vunpack.c.l.b16 %v348
        %v552 = vunpack.c.l.b16 %v349
        %v553 = vunpack.c.l.b16 %v350
        %v554 = vunpack.c.l.b16 %v351
        %v555 = vunpack.c.l.b16 %v352
        %v556 = vunpack.c.l.b16 %v353
        %v557 = vunpack.c.l.b16 %v354
        %v558 = vunpack.c.l.b16 %v355
        %v559 = vunpack.c.l.b16 %v356
        %v560 = vunpack.c.l.b16 %v357
        %v561 = vunpack.c.l.b16 %v358
        %v562 = vunpack.c.l.b16 %v359
        %v563 = vunpack.c.l.b16 %v360
        %v564 = vunpack.c.l.b16 %v361
        %v565 = vunpack.c.l.b16 %v362
        %v566 = vunpack.c.l.b16 %v363
        %v567 = vunpack.c.l.b16 %v364
        %v568 = vunpack.c.l.b16 %v365
        %v569 = vunpack.c.l.b16 %v366
        %v570 = vunpack.c.l.b16 %v367
        %v571 = vunpack.c.l.b16 %v368
        %v572 = vunpack.c.l.b16 %v369
        %v573 = vunpack.c.l.b16 %v370
        %v574 = vunpack.c.l.b16 %v371
        %v575 = vunpack.c.l.b16 %v372
        %v576 = vunpack.c.l.b16 %v373
        %v577 = vunpack.c.l.b16 %v374
        %v578 = vunpack.c.l.b16 %v375
        %v579 = vunpack.c.l.b16 %v376
        %v580 = vunpack.c.l.b16 %v377
        %v581 = vunpack.c.l.b16 %v378
        %v582 = vunpack.c.l.b16 %v379
        %v583 = vunpack.c.l.b16 %v380
        %v584 = vunpack.c.l.b16 %v381
        %v585 = vunpack.c.l.b16 %v382
        %v586 = vunpack.c.l.b16 %v383
        %v587 = vunpack.c.l.b16 %v384
        %v588 = vunpack.c.l.b16 %v385
        %v589 = vunpack.c.l.b16 %v386
        %v590 = vunpack.c.l.b16 %v387
        %v591 = vunpack.c.l.b16 %v388
        %v592 = vunpack.c.l.b16 %v389
        %v593 = vunpack.c.l.b16 %v390
        %v594 = vunpack.c.l.b16 %v391
        %v595 = vunpack.c.l.b16 %v392
        %v596 = vunpack.c.l.b16 %v393
        %v597 = vunpack.c.l.b16 %v394
        %v598 = vpack.c.b16 %v501, %v500
        %v599 = vpack.c.b16 %v503, %v502
        %v600 = vpack.c.b16 %v505, %v504
        %v601 = vpack.c.b16 %v507, %v506
        %v602 = vpack.c.b16 %v509, %v508
        %v603 = vpack.c.b16 %v511, %v510
        %v604 = vpack.c.b16 %v513, %v512
        %v605 = vpack.c.b16 %v515, %v514
        %v606 = vpack.c.b16 %v517, %v516
        %v607 = vpack.c.b16 %v519, %v518
        %v608 = vpack.c.b16 %v521, %v520
        %v609 = vpack.c.b16 %v523, %v522
        %v610 = vpack.c.b16 %v525, %v524
        %v611 = vpack.c.b16 %v527, %v526
        %v612 = vpack.c.b16 %v529, %v528
        %v613 = vpack.c.b16 %v531, %v530
        %v614 = vpack.c.b16 %v533, %v532
        %v615 = vpack.c.b16 %v535, %v534
        %v616 = vpack.c.b16 %v537, %v536
        %v617 = vpack.c.b16 %v539, %v538
        %v618 = vpack.c.b16 %v541, %v540
        %v619 = vpack.c.b16 %v543, %v542
        %v620 = vpack.c.b16 %v545, %v544
        %v621 = vpack.c.b16 %v547, %v546
        %v622 = vpack.c.b16 %v549, %v548
        %v623 = vpack.c.b16 %v551, %v550
        %v624 = vpack.c.b16 %v553, %v552
        %v625 = vpack.c.b16 %v555, %v554
        %v626 = vpack.c.b16 %v557, %v556
        %v627 = vpack.c.b16 %v559, %v558
        %v628 = vpack.c.b16 %v561, %v560
        %v629 = vpack.c.b16 %v563, %v562
        %v630 = vpack.c.b16 %v565, %v564
        %v631 = vpack.c.b16 %v567, %v566
        %v632 = vpack.c.b16 %v569, %v568
        %v633 = vpack.c.b16 %v571, %v570
        %v634 = vpack.c.b16 %v573, %v572
        %v635 = vpack.c.b16 %v575, %v574
        %v636 = vpack.c.b16 %v577, %v576
        %v637 = vpack.c.b16 %v579, %v578
        %v638 = vpack.c.b16 %v581, %v580
        %v639 = vpack.c.b16 %v583, %v582
        %v640 = vpack.c.b16 %v585, %v584
        %v641 = vpack.c.b16 %v587, %v586
        %v642 = vpack.c.b16 %v589, %v588
        %v643 = vpack.c.b16 %v591, %v590
        %v644 = vpack.c.b16 %v593, %v592
        %v645 = vpack.c.b16 %v595, %v594
        %v646 = vpack.c.b16 %v597, %v596
        %vm696 = vcmask 130048
        %v698 = vsel %vm696, %v296, 0
        %700 = vmatprep.subr.bf16.mxu0 0
        %701 = vmatpush1.bf16.msra.mxu0 %v605
        %702 = vmatprep.subr.bf16.mxu0 0
        %703 = vmatpush1.bf16.msra.mxu0 %v604
        %704 = vmatprep.subr.bf16.mxu0 0
        %705 = vmatpush1.bf16.msra.mxu0 %v603
        %706 = vmatprep.subr.bf16.mxu0 0
        %707 = vmatpush1.bf16.msra.mxu0 %v602
        %708 = vmatprep.subr.bf16.mxu0 0
        %709 = vmatpush1.bf16.msra.mxu0 %v601
        %710 = vmatprep.subr.bf16.mxu0 0
        %711 = vmatpush1.bf16.msra.mxu0 %v600
        %712 = vmatprep.subr.bf16.mxu0 0
        %713 = vmatpush1.bf16.msra.mxu0 %v599
        %714 = vmatprep.subr.bf16.mxu0 0
        %715 = vmatpush1.bf16.msra.mxu0 %v598
        %716 = vmatprep.subr.bf16.mxu0 0
        %717 = vmatpush2.bf16.msra.mxu0 %v613
        %718 = vmatprep.subr.bf16.mxu0 0
        %719 = vmatpush2.bf16.msra.mxu0 %v612
        %720 = vmatprep.subr.bf16.mxu0 0
        %721 = vmatpush2.bf16.msra.mxu0 %v611
        %722 = vmatprep.subr.bf16.mxu0 0
        %723 = vmatpush2.bf16.msra.mxu0 %v610
        %724 = vmatprep.subr.bf16.mxu0 0
        %725 = vmatpush2.bf16.msra.mxu0 %v609
        %726 = vmatprep.subr.bf16.mxu0 0
        %727 = vmatpush2.bf16.msra.mxu0 %v608
        %728 = vmatprep.subr.bf16.mxu0 0
        %729 = vmatpush2.bf16.msra.mxu0 %v607
        %730 = vmatprep.subr.bf16.mxu0 0
        %731 = vmatpush2.bf16.msra.mxu0 %v606
        %732 = vmatprep.mubr.bf16.mxu0 %v291
        %733 = vmatmul.mubr.bf16.gmra.mxu0 %v290
        %v734 = vpop.f32.mrf.mxu0
        %v735 = vadd.f32 %v400, %v734
        %v736 = vpop.f32.mrf.mxu0
        %v737 = vpop.f32.mrf.mxu0
        %v738 = vadd.f32 %v400, %v737
        %v739 = vpop.f32.mrf.mxu0
        %740 = vdwg.mxu0
        %741 = vmatprep.subr.bf16.mxu0 0
        %742 = vmatpush1.bf16.msra.mxu0 %v621
        %743 = vmatprep.subr.bf16.mxu0 0
        %744 = vmatpush1.bf16.msra.mxu0 %v620
        %745 = vmatprep.subr.bf16.mxu0 0
        %746 = vmatpush1.bf16.msra.mxu0 %v619
        %747 = vmatprep.subr.bf16.mxu0 0
        %748 = vmatpush1.bf16.msra.mxu0 %v618
        %749 = vmatprep.subr.bf16.mxu0 0
        %750 = vmatpush1.bf16.msra.mxu0 %v617
        %751 = vmatprep.subr.bf16.mxu0 0
        %752 = vmatpush1.bf16.msra.mxu0 %v616
        %753 = vmatprep.subr.bf16.mxu0 0
        %754 = vmatpush1.bf16.msra.mxu0 %v615
        %755 = vmatprep.subr.bf16.mxu0 0
        %756 = vmatpush1.bf16.msra.mxu0 %v614
        %757 = vmatprep.subr.bf16.mxu0 0
        %758 = vmatpush2.bf16.msra.mxu0 %v629
        %759 = vmatprep.subr.bf16.mxu0 0
        %760 = vmatpush2.bf16.msra.mxu0 %v628
        %761 = vmatprep.subr.bf16.mxu0 0
        %762 = vmatpush2.bf16.msra.mxu0 %v627
        %763 = vmatprep.subr.bf16.mxu0 0
        %764 = vmatpush2.bf16.msra.mxu0 %v626
        %765 = vmatprep.subr.bf16.mxu0 0
        %766 = vmatpush2.bf16.msra.mxu0 %v625
        %767 = vmatprep.subr.bf16.mxu0 0
        %768 = vmatpush2.bf16.msra.mxu0 %v624
        %769 = vmatprep.subr.bf16.mxu0 0
        %770 = vmatpush2.bf16.msra.mxu0 %v623
        %771 = vmatprep.subr.bf16.mxu0 0
        %772 = vmatpush2.bf16.msra.mxu0 %v622
        %773 = vmatprep.mubr.bf16.mxu0 %v293
        %774 = vmatmul.mubr.bf16.gmra.mxu0 %v292
        %v775 = vpop.f32.mrf.mxu0
        %v776 = vadd.f32 %v735, %v775
        %v777 = vpop.f32.mrf.mxu0
        %v778 = vpop.f32.mrf.mxu0
        %v779 = vadd.f32 %v738, %v778
        %v780 = vpop.f32.mrf.mxu0
        %781 = vdwg.mxu0
        %782 = vmatprep.subr.bf16.mxu0 0
        %783 = vmatpush1.bf16.msra.mxu0 %v637
        %784 = vmatprep.subr.bf16.mxu0 0
        %785 = vmatpush1.bf16.msra.mxu0 %v636
        %786 = vmatprep.subr.bf16.mxu0 0
        %787 = vmatpush1.bf16.msra.mxu0 %v635
        %788 = vmatprep.subr.bf16.mxu0 0
        %789 = vmatpush1.bf16.msra.mxu0 %v634
        %790 = vmatprep.subr.bf16.mxu0 0
        %791 = vmatpush1.bf16.msra.mxu0 %v633
        %792 = vmatprep.subr.bf16.mxu0 0
        %793 = vmatpush1.bf16.msra.mxu0 %v632
        %794 = vmatprep.subr.bf16.mxu0 0
        %795 = vmatpush1.bf16.msra.mxu0 %v631
        %796 = vmatprep.subr.bf16.mxu0 0
        %797 = vmatpush1.bf16.msra.mxu0 %v630
        %798 = vmatprep.subr.bf16.mxu0 0
        %799 = vmatpush2.bf16.msra.mxu0 %v645
        %800 = vmatprep.subr.bf16.mxu0 0
        %801 = vmatpush2.bf16.msra.mxu0 %v644
        %802 = vmatprep.subr.bf16.mxu0 0
        %803 = vmatpush2.bf16.msra.mxu0 %v643
        %804 = vmatprep.subr.bf16.mxu0 0
        %805 = vmatpush2.bf16.msra.mxu0 %v642
        %806 = vmatprep.subr.bf16.mxu0 0
        %807 = vmatpush2.bf16.msra.mxu0 %v641
        %808 = vmatprep.subr.bf16.mxu0 0
        %809 = vmatpush2.bf16.msra.mxu0 %v640
        %810 = vmatprep.subr.bf16.mxu0 0
        %811 = vmatpush2.bf16.msra.mxu0 %v639
        %812 = vmatprep.subr.bf16.mxu0 0
        %813 = vmatpush2.bf16.msra.mxu0 %v638
        %814 = vmatprep.mubr.bf16.mxu0 %v295
        %815 = vmatmul.mubr.bf16.gmra.mxu0 %v294
        %v816 = vpop.f32.mrf.mxu0
        %v817 = vadd.f32 %v776, %v816
        %v818 = vpop.f32.mrf.mxu0
        %v819 = vpop.f32.mrf.mxu0
        %v820 = vadd.f32 %v779, %v819
        %v821 = vpop.f32.mrf.mxu0
        %822 = vdwg.mxu0
        %823 = vmatprep.subr.bf16.mxu0 0
        %824 = vmatpush1.bf16.msra.mxu0 0
        %825 = vmatprep.subr.bf16.mxu0 0
        %826 = vmatpush1.bf16.msra.mxu0 0
        %827 = vmatprep.subr.bf16.mxu0 0
        %828 = vmatpush1.bf16.msra.mxu0 0
        %829 = vmatprep.subr.bf16.mxu0 0
        %830 = vmatpush1.bf16.msra.mxu0 0
        %831 = vmatprep.subr.bf16.mxu0 0
        %832 = vmatpush1.bf16.msra.mxu0 0
        %833 = vmatprep.subr.bf16.mxu0 0
        %834 = vmatpush1.bf16.msra.mxu0 0
        %835 = vmatprep.subr.bf16.mxu0 0
        %836 = vmatpush1.bf16.msra.mxu0 0
        %837 = vmatprep.subr.bf16.mxu0 0
        %838 = vmatpush1.bf16.msra.mxu0 %v646
        %839 = vmatprep.subr.bf16.mxu0 0
        %840 = vmatpush2.bf16.msra.mxu0 0
        %841 = vmatprep.subr.bf16.mxu0 0
        %842 = vmatpush2.bf16.msra.mxu0 0
        %843 = vmatprep.subr.bf16.mxu0 0
        %844 = vmatpush2.bf16.msra.mxu0 0
        %845 = vmatprep.subr.bf16.mxu0 0
        %846 = vmatpush2.bf16.msra.mxu0 0
        %847 = vmatprep.subr.bf16.mxu0 0
        %848 = vmatpush2.bf16.msra.mxu0 0
        %849 = vmatprep.subr.bf16.mxu0 0
        %850 = vmatpush2.bf16.msra.mxu0 0
        %851 = vmatprep.subr.bf16.mxu0 0
        %852 = vmatpush2.bf16.msra.mxu0 0
        %853 = vmatprep.subr.bf16.mxu0 0
        %854 = vmatpush2.bf16.msra.mxu0 0
        %855 = vmatprep.mubr.bf16.mxu0 0
        %856 = vmatmul.mubr.bf16.gmra.mxu0 %v698
        %v857 = vpop.f32.mrf.mxu0
        %v858 = vadd.f32 %v817, %v857
        %v859 = vpop.f32.mrf.mxu0
        %v860 = vpop.f32.mrf.mxu0
        %v861 = vadd.f32 %v820, %v860
        %v862 = vpop.f32.mrf.mxu0
        %863 = vdwg.mxu0
        %v864 = vmax.f32 %v858, 0.0
        %v865 = vmax.f32 %v861, 0.0
        %v866 = vpack.c.bf16 %v865, %v864
        %v867 = vld [vmem:[#allocation7] sm:$0xf]
        %v868 = vld [vmem:[#allocation7 + $0x4] sm:$0xf]
        %v869 = vld [vmem:[#allocation7 + $0x8] sm:$0xf]
        %v870 = vld [vmem:[#allocation7 + $0xc] sm:$0xf]
        %v871 = vld [vmem:[#allocation7 + $0x10] sm:$0xf]
        %v872 = vld [vmem:[#allocation7 + $0x14] sm:$0xf]
        %v873 = vld [vmem:[#allocation7 + $0x18] sm:$0xf]
        %v874 = vld [vmem:[#allocation7 + $0x1c] sm:$0xf]
        %v875 = vld [vmem:[#allocation7 + $0x20] sm:$0xf]
        %v876 = vld [vmem:[#allocation7 + $0x24] sm:$0xf]
        %v877 = vld [vmem:[#allocation7 + $0x28] sm:$0xf]
        %v878 = vld [vmem:[#allocation7 + $0x2c] sm:$0xf]
        %v879 = vld [vmem:[#allocation7 + $0x30] sm:$0xf]
        %v880 = vld [vmem:[#allocation7 + $0x34] sm:$0xf]
        %v881 = vld [vmem:[#allocation7 + $0x38] sm:$0xf]
        %v882 = vld [vmem:[#allocation7 + $0x3c] sm:$0xf]
        %v883 = vld [vmem:[%s4] sm:$0x1]
        %v885 = vlaneseq
        %v886 = vshrl.u32 %v885, 7
        %v887 = vsub.s32 0, %v886
        %v888 = vrot.slane %v883, %v887
        %v906 = vunpack.c.l.b16 %v867
        %v907 = vunpack.c.l.b16 %v868
        %v908 = vunpack.c.l.b16 %v869
        %v909 = vunpack.c.l.b16 %v870
        %v910 = vunpack.c.l.b16 %v871
        %v911 = vunpack.c.l.b16 %v872
        %v912 = vunpack.c.l.b16 %v873
        %v913 = vunpack.c.l.b16 %v874
        %v914 = vunpack.c.l.b16 %v875
        %v915 = vunpack.c.l.b16 %v876
        %v916 = vunpack.c.l.b16 %v877
        %v917 = vunpack.c.l.b16 %v878
        %v918 = vunpack.c.l.b16 %v879
        %v919 = vunpack.c.l.b16 %v880
        %v920 = vunpack.c.l.b16 %v881
        %v921 = vunpack.c.l.b16 %v882
        %v922 = vpack.c.b16 %v907, %v906
        %v923 = vpack.c.b16 %v909, %v908
        %v924 = vpack.c.b16 %v911, %v910
        %v925 = vpack.c.b16 %v913, %v912
        %v926 = vpack.c.b16 %v915, %v914
        %v927 = vpack.c.b16 %v917, %v916
        %v928 = vpack.c.b16 %v919, %v918
        %v929 = vpack.c.b16 %v921, %v920
        %938 = vmatprep.subr.bf16.mxu0 0
        %939 = vmatpush1.bf16.msra.mxu0 %v929
        %940 = vmatprep.subr.bf16.mxu0 0
        %941 = vmatpush1.bf16.msra.mxu0 %v928
        %942 = vmatprep.subr.bf16.mxu0 0
        %943 = vmatpush1.bf16.msra.mxu0 %v927
        %944 = vmatprep.subr.bf16.mxu0 0
        %945 = vmatpush1.bf16.msra.mxu0 %v926
        %946 = vmatprep.subr.bf16.mxu0 0
        %947 = vmatpush1.bf16.msra.mxu0 %v925
        %948 = vmatprep.subr.bf16.mxu0 0
        %949 = vmatpush1.bf16.msra.mxu0 %v924
        %950 = vmatprep.subr.bf16.mxu0 0
        %951 = vmatpush1.bf16.msra.mxu0 %v923
        %952 = vmatprep.subr.bf16.mxu0 0
        %953 = vmatpush1.bf16.msra.mxu0 %v922
        %954 = vmatprep.subr.bf16.mxu0 0
        %955 = vmatpush2.bf16.msra.mxu0 0
        %956 = vmatprep.subr.bf16.mxu0 0
        %957 = vmatpush2.bf16.msra.mxu0 0
        %958 = vmatprep.subr.bf16.mxu0 0
        %959 = vmatpush2.bf16.msra.mxu0 0
        %960 = vmatprep.subr.bf16.mxu0 0
        %961 = vmatpush2.bf16.msra.mxu0 0
        %962 = vmatprep.subr.bf16.mxu0 0
        %963 = vmatpush2.bf16.msra.mxu0 0
        %964 = vmatprep.subr.bf16.mxu0 0
        %965 = vmatpush2.bf16.msra.mxu0 0
        %966 = vmatprep.subr.bf16.mxu0 0
        %967 = vmatpush2.bf16.msra.mxu0 0
        %968 = vmatprep.subr.bf16.mxu0 0
        %969 = vmatpush2.bf16.msra.mxu0 0
        %970 = vmatprep.mubr.bf16.mxu0 0
        %971 = vmatmul.mubr.bf16.gmra.mxu0 %v866
        %v972 = vpop.f32.mrf.mxu0
        %v973 = vadd.f32 %v888, %v972
        %v974 = vpop.f32.mrf.mxu0
        %v975 = vpop.f32.mrf.mxu0
        %v976 = vadd.f32 %v888, %v975
        %v977 = vpop.f32.mrf.mxu0
        %978 = vdwg.mxu0
        %979 = vst [vmem:[%s272] sm:$0xff] %v973
        %980 = vst [vmem:[%s272 + $0x8] sm:$0xff] %v976
        %s981 = sand.u32 %s141, 1
        %s982 = scalar_lea.sflag [#allocation4], %s981
        %s983 = sand.u32 %s141, 1
        %s984 = smul.addr %s983, 16
        %s985 = scalar_lea.vmem [#allocation8], %s984
        // Predicated region
        $region53: #{tpu_custom_call.1} parent=39 // pred_check
          %p986 = pneg %p151
        $region54: #{tpu_custom_call.1} parent=39 // pred_check_branch
          %988 = sbr.rel (%p986) target = $region56
        $region55: #{tpu_custom_call.1} parent=39 // pred_region
          %s989 = smul.u32 2, %s23
          %s991 = ssub.s32 256, 256
          %992 = vsyncadd %s982, %s991
          %s993 = smul.addr %s989, 128
          %s994 = scalar_lea.hbm %s5, %s993
          %s995 = sshll.u32 %s985, 4
          %s996 = int_to_ptr.vmem [resolvable:$true] %s995
          %1001 = dma.vmem_to_hbm [thread:$0]  %s996, 256, %s994, %s982, 128, 128, 8
        $region56: #{tpu_custom_call.1} parent=39 // pred_fallthru
          _
      $region40: #{tpu_custom_call.1} parent=5 // pred_fallthru
        _
      %p1002 = scmp.le.s32.totalorder 2, %s18
      // Predicated region
      $region57: #{tpu_custom_call.1} parent=5 // pred_check
        %p1003 = pneg %p1002
      $region58: #{tpu_custom_call.1} parent=5 // pred_check_branch
        %1005 = sbr.rel (%p1003) target = $region60
      $region59: #{tpu_custom_call.1} parent=5 // pred_region
        %s1006 = ssub.s32 %s18, 2
        // Predicated region
        $region61: #{tpu_custom_call.1} parent=59 // pred_check
          %p1007 = pneg %p157
        $region62: #{tpu_custom_call.1} parent=59 // pred_check_branch
          %1009 = sbr.rel (%p1007) target = $region64
        $region63: #{tpu_custom_call.1} parent=59 // pred_region
          %s1010 = sand.u32 %s142, 1
          %s1011 = scalar_lea.sflag [#allocation4], %s1010
          %s1012 = sand.u32 %s142, 1
          %s1013 = smul.addr %s1012, 16
          %s1014 = scalar_lea.vmem [#allocation8], %s1013
          %1015 = dma.done %s1011, 256
        $region64: #{tpu_custom_call.1} parent=59 // pred_fallthru
          _
      $region60: #{tpu_custom_call.1} parent=5 // pred_fallthru
        _
    $region6: #{tpu_custom_call.1} parent=1 // loop_footer
      %s22 = sadd.s32 1, %s18
    $region7: #{tpu_custom_call.1} parent=1 // loop_footer_branch
      %17 = sbr.rel target = $region3
    $region8: #{tpu_custom_call.1} parent=1 // loop_exit
      _
    %1016 = vsyncpa [#allocation3], 1
    %s1017 = scalar_lea.sflag [#allocation3], 1
    %1018 = vsyncpa %s1017, 1
    %1019 = vsyncpa [#allocation6], 1
    %1020 = vsyncpa [#allocation4], 1
    %s1021 = scalar_lea.sflag [#allocation4], 1
    %1022 = vsyncpa %s1021, 1

</llo_original>
